<compile_context>
chip_gen: v7x
topology: tpu7x:2x2x1
jax: 0.10.0
libtpu: 0.0.40
codegen_flags: <defaults>
</compile_context>

<pallas_src>
import functools

import numpy as np

import jax
import jax.numpy as jnp
from jax import lax
from jax.experimental import pallas as pl
from jax.experimental.pallas import tpu as pltpu

# Non-transposed LHS, transposed RHS contraction (the q @ k^T pattern): contract the last
# (embedding) axis of both operands on the MXU.  Natively supported by Mosaic.
_NT_DIMS = (((1,), (1,)), ((), ()))


def _ii_loss_kernel(x_ref, tgt_ref, stats_ref, mu_ref, out_ref, acc_ref):
    i = pl.program_id(0)             # chunk (maps across TensorCores on v7x)
    j = pl.program_id(1)             # tile within chunk (sequential, pipelined)
    last_j = pl.num_programs(1) - 1

    @pl.when(j == 0)
    def _init():
        acc_ref[0] = jnp.float32(0.0)   # sum_{known} ||x_i - mu_{t_i}||^2 for this chunk
        acc_ref[1] = jnp.float32(0.0)   # number of known samples in this chunk

    # ---- hot loop: strictly DMA-bound streaming over x ---------------------------------
    x = x_ref[...].astype(jnp.float32)   # bf16 DMA of the dominant input, f32 math
    tgt = tgt_ref[...]                   # (TILE_N, 1) int32, negative => unknown
    musq = stats_ref[1:2, :]             # (1, C) ||mu_c||^2, hoisted to a host-side input

    tile_n = x.shape[0]
    n_cls = musq.shape[1]

    known = tgt >= 0                                               # (TILE_N, 1) bool
    known_f = known.astype(jnp.float32)
    cls_iota = lax.broadcasted_iota(jnp.int32, (tile_n, n_cls), 1)
    oh = jnp.where((cls_iota == tgt) & known,
                   jnp.float32(1.0), jnp.float32(0.0))             # (TILE_N, C)

    # MXU-friendly: contract over D (the big axis), never over the tiny C axis.
    s = lax.dot_general(x, mu_ref[...], _NT_DIMS,
                        preferred_element_type=jnp.float32)        # (TILE_N, C)
    xsq = jnp.sum(x * x, axis=1, keepdims=True)                    # (TILE_N, 1)

    # sum_{known i in tile} ||x_i - mu_{t_i}||^2, algebraic form with f32 accumulation.
    # NOTE: the expansion can lose precision when embeddings sit very close to their
    # centers; keep f32 xsq/musq/accumulation if tolerances are ever tightened.
    partial = jnp.sum(known_f * xsq) + jnp.sum(oh * (musq - 2.0 * s))
    acc_ref[0] = acc_ref[0] + partial
    acc_ref[1] = acc_ref[1] + jnp.sum(known_f)

    # ---- finalize: write the lane-dense (8, 128) per-chunk output once -----------------
    @pl.when(j == last_j)
    def _write_partials():
        row = lax.broadcasted_iota(jnp.int32, out_ref.shape, 0)
        lane = lax.broadcasted_iota(jnp.int32, out_ref.shape, 1)
        out_ref[...] = jnp.where(
            (row == 0) & (lane == 0), acc_ref[0],
            jnp.where((row == 0) & (lane == 1), acc_ref[1], jnp.float32(0.0)))

    # Inter-separation (O(C^2 D)) runs exactly once: last tile of chunk 0 only.
    @pl.when((j == last_j) & (i == 0))
    def _inter():
        mu = mu_ref[...]                                       # (C, D) f32
        present = stats_ref[0:1, :]                            # (1, C) presence flags
        sq_col = jnp.sum(mu * mu, axis=1, keepdims=True)       # (C, 1)
        gram = lax.dot_general(mu, mu, _NT_DIMS,
                               preferred_element_type=jnp.float32)   # (C, C)
        dist = jnp.maximum(sq_col + stats_ref[1:2, :] - 2.0 * gram, 0.0)
        rr = lax.broadcasted_iota(jnp.int32, (n_cls, n_cls), 0)
        cc = lax.broadcasted_iota(jnp.int32, (n_cls, n_cls), 1)
        pair_ok = (present > 0.5) & (present.T > 0.5) & (rr != cc)
        dist = jnp.where(pair_ok, dist, jnp.float32(1e24))
        # NOTE: with < 2 present classes PyTorch would yield intra - alpha*1e24; we degrade
        # gracefully to inter == 0 instead (documented deviation).
        inter_neg = jnp.where(jnp.sum(present) >= 2.0, -jnp.min(dist), jnp.float32(0.0))
        row = lax.broadcasted_iota(jnp.int32, out_ref.shape, 0)
        lane = lax.broadcasted_iota(jnp.int32, out_ref.shape, 1)
        out_ref[...] = out_ref[...] + jnp.where((row == 0) & (lane == 2),
                                                inter_neg, jnp.float32(0.0))


def _round_up(v, m):
    return ((v + m - 1) // m) * m


@functools.lru_cache(maxsize=None)
def _tpu_defaults():
    """Returns (num_chunks, x-tile byte budget, vmem_limit_bytes) per TPU generation."""
    vmem_bytes = 0
    try:
        vmem_bytes = int(getattr(pltpu.get_tpu_info(), "vmem_capacity_bytes", 0) or 0)
    except Exception:
        vmem_bytes = 0
    if vmem_bytes == 0:
        # Unknown part: conservative settings that are safe everywhere.
        return 1, 5 * 1024 * 1024, 32 * 1024 * 1024
    if vmem_bytes <= 64 * 1024 * 1024:
        # v7x: 64 MiB VMEM per TC but 2 TensorCores -> chunk across cores, modest tiles.
        return 2, 5 * 1024 * 1024, 32 * 1024 * 1024
    # v5e / v6e: 128 MiB VMEM, single TensorCore -> one chunk, bigger tiles, 64 MiB limit.
    return 1, 12 * 1024 * 1024, 64 * 1024 * 1024


@functools.partial(
    jax.jit,
    static_argnames=("alpha", "num_chunks", "tile_n", "vmem_limit", "x_dtype"))
def _ii_loss_impl(x, target, centers, *, alpha, num_chunks, tile_n, vmem_limit, x_dtype):
    n, emb = x.shape
    n_cls = centers.shape[0]

    x = x.astype(x_dtype)                    # bf16 by default: halves HBM traffic of x
    centers = centers.astype(jnp.float32)
    target = jnp.where(target >= 0, target, -1).astype(jnp.int32)

    # Tiny host-side glue: class presence + hoisted ||mu_c||^2 packed lane-dense as (2, C).
    known = target >= 0
    clamped = jnp.where(known, target, 0)
    counts = jnp.zeros((n_cls,), jnp.float32).at[clamped].add(known.astype(jnp.float32))
    present = (counts > 0.0).astype(jnp.float32)
    musq = jnp.sum(centers * centers, axis=1)
    stats = jnp.stack([present, musq], axis=0)            # (2, C) f32

    n_per_chunk = -(-n // num_chunks)
    tiles_per_chunk = max(1, -(-n_per_chunk // tile_n))
    n_pad = num_chunks * tiles_per_chunk * tile_n
    if n_pad != n:   # pad with "unknown" rows; they are masked out inside the kernel
        x = jnp.pad(x, ((0, n_pad - n), (0, 0)))
        target = jnp.pad(target, (0, n_pad - n), constant_values=-1)
    tgt2d = target.reshape(n_pad, 1)

    tpc = tiles_per_chunk
    grid = (num_chunks, tiles_per_chunk)

    cost = pl.CostEstimate(
        flops=int(2 * n_pad * emb * n_cls + 2 * n_cls * n_cls * emb + 4 * n_pad * emb),
        transcendentals=0,
        bytes_accessed=int(n_pad * emb * np.dtype(x_dtype).itemsize + n_pad * 4
                           + n_cls * emb * 4 + 2 * n_cls * 4
                           + num_chunks * 8 * 128 * 4),
    )

    partials = pl.pallas_call(
        _ii_loss_kernel,
        out_shape=jax.ShapeDtypeStruct((num_chunks * 8, 128), jnp.float32),
        grid_spec=pltpu.PrefetchScalarGridSpec(
            num_scalar_prefetch=0,
            grid=grid,
            in_specs=[
                pl.BlockSpec((tile_n, emb), lambda i, j: (i * tpc + j, 0)),  # x tile
                pl.BlockSpec((tile_n, 1), lambda i, j: (i * tpc + j, 0)),    # int32 targets
                pl.BlockSpec((2, n_cls), lambda i, j: (0, 0)),               # present/||mu||^2
                pl.BlockSpec((n_cls, emb), lambda i, j: (0, 0)),             # centers (resident)
            ],
            out_specs=pl.BlockSpec((8, 128), lambda i, j: (i, 0)),           # per-chunk partials
            scratch_shapes=[pltpu.SMEM((2,), jnp.float32)],                  # scalar accumulators
        ),
        compiler_params=pltpu.CompilerParams(
            dimension_semantics=("parallel", "arbitrary"),
            vmem_limit_bytes=vmem_limit,
        ),
        cost_estimate=cost,
    )(x, tgt2d, stats, centers)

    intra_sum = jnp.sum(partials[:, 0])        # rows other than i*8 are exact zeros
    n_known_total = jnp.sum(partials[:, 1])
    inter_neg = partials[0, 2]

    loss = intra_sum / jnp.maximum(n_known_total, 1.0) + jnp.float32(alpha) * inter_neg
    return jnp.where(n_known_total > 0.0, loss, jnp.float32(0.0))


def ii_loss(x, target, centers, alpha=1.0, num_chunks=None, tile_n=None,
            x_dtype=jnp.bfloat16):
    """II loss forward (eval-mode running centers).  Returns a scalar float32 loss."""
    n, emb = x.shape
    n_cls = centers.shape[0]

    dflt_chunks, x_budget, vmem_limit = _tpu_defaults()
    if num_chunks is None:
        num_chunks = dflt_chunks
    num_chunks = max(1, int(num_chunks))

    x_itemsize = np.dtype(x_dtype).itemsize
    if tile_n is None:
        # Generation-aware x-tile budget; also cap the (tile_n, C) f32 temporaries and the
        # 128-lane-inflated (tile_n, 1) int32 target block (~tile_n*512 B/buffer) to ~6 MiB.
        lane_c = _round_up(max(n_cls, 1), 128)
        t_from_x = max(16, x_budget // max(emb * x_itemsize, 1))
        t_from_tmp = max(16, (6 * 1024 * 1024) // (lane_c * 4))
        tile_n = min(8192, t_from_x, t_from_tmp)
    n_per_chunk = -(-n // num_chunks)
    tile_n = max(16, min(_round_up(int(tile_n), 16), _round_up(n_per_chunk, 16)))

    return _ii_loss_impl(x, target, centers, alpha=float(alpha),
                         num_chunks=num_chunks, tile_n=int(tile_n),
                         vmem_limit=int(vmem_limit), x_dtype=x_dtype)


def _ii_loss_reference(x, target, centers, alpha):
    """Pure-JAX reference of the original PyTorch forward (eval-mode centers)."""
    x = x.astype(jnp.float32)
    centers = centers.astype(jnp.float32)
    known = target >= 0
    known_f = known.astype(jnp.float32)
    n_known = jnp.sum(known_f)
    clamped = jnp.where(known, target, 0)
    diff2 = jnp.sum((x - centers[clamped]) ** 2, axis=1)
    intra = jnp.sum(diff2 * known_f) / jnp.maximum(n_known, 1.0)

    counts = jnp.zeros((centers.shape[0],), jnp.float32).at[clamped].add(known_f)
    present = counts > 0.0
    d2 = jnp.sum((centers[:, None, :] - centers[None, :, :]) ** 2, axis=-1)
    eye = jnp.eye(centers.shape[0], dtype=bool)
    valid = present[:, None] & present[None, :] & (~eye)
    d2 = jnp.where(valid, d2, 1e24)
    inter = jnp.where(jnp.sum(present) >= 2, -jnp.min(d2), 0.0)
    loss = intra + alpha * inter
    return jnp.where(n_known > 0.0, loss, 0.0)


if __name__ == "__main__":
    key = jax.random.PRNGKey(0)
    k_x, k_mu, k_x2, k_mu2, k_t2 = jax.random.split(key, 5)

    # --- small, module-scale shapes; default (bf16 x) path --------------------------------
    N, D, C = 8, 32, 4
    x = jax.random.normal(k_x, (N, D), dtype=jnp.float32)
    centers = jax.random.normal(k_mu, (C, D), dtype=jnp.float32)
    target = jnp.array([0, 1, 2, 3, 0, 1, 2, -1], dtype=jnp.int32)   # one unknown sample

    loss = ii_loss(x, target, centers, alpha=1.0)
    jax.block_until_ready(loss)

    ref_f32 = _ii_loss_reference(x, target, centers, 1.0)
    x_rounded = x.astype(jnp.bfloat16).astype(jnp.float32)
    ref_bf16 = _ii_loss_reference(x_rounded, target, centers, 1.0)
    if not jnp.allclose(loss, ref_bf16, rtol=1e-3, atol=5e-2):
        raise AssertionError(
            f"mismatch (bf16-consistent): kernel={float(loss)} ref={float(ref_bf16)}")
    if not jnp.allclose(loss, ref_f32, rtol=2e-2, atol=2e-1):
        raise AssertionError(
            f"mismatch (f32 reference): kernel={float(loss)} ref={float(ref_f32)}")

    # --- multi-tile / multi-chunk grid path, exact f32 streaming --------------------------
    N2, D2, C2 = 192, 128, 6
    x2 = jax.random.normal(k_x2, (N2, D2), dtype=jnp.float32)
    centers2 = jax.random.normal(k_mu2, (C2, D2), dtype=jnp.float32)
    target2 = jax.random.randint(k_t2, (N2,), minval=-1, maxval=C2, dtype=jnp.int32)

    loss2 = ii_loss(x2, target2, centers2, alpha=0.5,
                    num_chunks=2, tile_n=64, x_dtype=jnp.float32)
    jax.block_until_ready(loss2)
    ref2 = _ii_loss_reference(x2, target2, centers2, 0.5)
    if not jnp.allclose(loss2, ref2, rtol=1e-3, atol=5e-2):
        raise AssertionError(
            f"mismatch (tiled f32): kernel={float(loss2)} ref={float(ref2)}")

    print("KERNEL_OK")
</pallas_src>

<mosaic_0001>
module attributes {stable_mosaic.version = 11 : i64} {
  func.func @_ii_loss_kernel(%arg0: i32, %arg1: i32, %arg2: memref<16x32xbf16, #tpu.memory_space<vmem>>, %arg3: memref<16x1xi32, #tpu.memory_space<vmem>>, %arg4: memref<2x4xf32, #tpu.memory_space<vmem>>, %arg5: memref<4x32xf32, #tpu.memory_space<vmem>>, %arg6: memref<8x128xf32, #tpu.memory_space<vmem>>, %arg7: memref<2xf32, #tpu.memory_space<smem>>) attributes {dimension_semantics = [#tpu.dimension_semantics<parallel>, #tpu.dimension_semantics<arbitrary>], iteration_bounds = array<i64: 1, 1>, scalar_prefetch = 0 : i64, scratch_operands = 1 : i64, tpu.core_type = #tpu.core_type<tc>, window_params = [{transform_indices = @transform_0, window_bounds = array<i64: 16, 32>}, {transform_indices = @transform_1, window_bounds = array<i64: 16, 1>}, {pipeline_mode = #tpu.pipeline_mode<synchronous>, transform_indices = @transform_2, window_bounds = array<i64: 2, 4>}, {pipeline_mode = #tpu.pipeline_mode<synchronous>, transform_indices = @transform_3, window_bounds = array<i64: 4, 32>}, {transform_indices = @transform_4, window_bounds = array<i64: 8, 128>}]} {
    %c0_i32 = arith.constant 0 : i32
    %0 = arith.cmpi eq, %arg1, %c0_i32 : i32
    %1 = arith.extui %0 : i1 to i32
    %c0_i32_0 = arith.constant 0 : i32
    %2 = arith.cmpi ne, %1, %c0_i32_0 : i32
    scf.if %2 {
      %cst_24 = arith.constant 0.000000e+00 : f32
      %c0_25 = arith.constant 0 : index
      %57 = memref.load %arg7[%c0_25] : memref<2xf32, #tpu.memory_space<smem>>
      memref.store %cst_24, %arg7[%c0_25] : memref<2xf32, #tpu.memory_space<smem>>
      %cst_26 = arith.constant 0.000000e+00 : f32
      %c1_27 = arith.constant 1 : index
      %58 = memref.load %arg7[%c1_27] : memref<2xf32, #tpu.memory_space<smem>>
      memref.store %cst_26, %arg7[%c1_27] : memref<2xf32, #tpu.memory_space<smem>>
    } else {
    }
    %c0 = arith.constant 0 : index
    %c0_1 = arith.constant 0 : index
    %3 = vector.load %arg2[%c0, %c0_1] : memref<16x32xbf16, #tpu.memory_space<vmem>>, vector<16x32xbf16>
    %4 = arith.extf %3 : vector<16x32xbf16> to vector<16x32xf32>
    %c0_2 = arith.constant 0 : index
    %c0_3 = arith.constant 0 : index
    %5 = vector.load %arg3[%c0_2, %c0_3] : memref<16x1xi32, #tpu.memory_space<vmem>>, vector<16x1xi32>
    %c1 = arith.constant 1 : index
    %c0_4 = arith.constant 0 : index
    %6 = vector.load %arg4[%c1, %c0_4] : memref<2x4xf32, #tpu.memory_space<vmem>>, vector<1x4xf32>
    %c0_i32_5 = arith.constant 0 : i32
    %7 = vector.broadcast %c0_i32_5 : i32 to vector<16x1xi32>
    %8 = arith.cmpi sge, %5, %7 : vector<16x1xi32>
    %9 = arith.extui %8 : vector<16x1xi1> to vector<16x1xi32>
    %10 = arith.sitofp %9 : vector<16x1xi32> to vector<16x1xf32>
    %11 = tpu.iota {dimensions = array<i32: 1>} : vector<16x4xi32>
    %12 = vector.broadcast %5 : vector<16x1xi32> to vector<16x4xi32>
    %13 = arith.cmpi eq, %11, %12 : vector<16x4xi32>
    %14 = vector.broadcast %8 : vector<16x1xi1> to vector<16x4xi1>
    %15 = arith.andi %13, %14 : vector<16x4xi1>
    %cst = arith.constant 1.000000e+00 : f32
    %cst_6 = arith.constant 0.000000e+00 : f32
    %16 = vector.broadcast %cst : f32 to vector<16x4xf32>
    %17 = vector.broadcast %cst_6 : f32 to vector<16x4xf32>
    %18 = arith.select %15, %16, %17 : vector<16x4xi1>, vector<16x4xf32>
    %c0_7 = arith.constant 0 : index
    %c0_8 = arith.constant 0 : index
    %19 = vector.load %arg5[%c0_7, %c0_8] : memref<4x32xf32, #tpu.memory_space<vmem>>, vector<4x32xf32>
    %cst_9 = arith.constant dense<0.000000e+00> : vector<16x4xf32>
    %20 = tpu.matmul %4, %19, %cst_9 {dimension_numbers = #tpu.dot_dimension_numbers<[1], [1], [0], [0], [0, 0, 1, 0], [], []>} : vector<16x32xf32>, vector<4x32xf32>, vector<16x4xf32> -> vector<16x4xf32>
    %21 = arith.mulf %4, %4 : vector<16x32xf32>
    %cst_10 = arith.constant dense<0.000000e+00> : vector<16xf32>
    %22 = vector.multi_reduction <add>, %21, %cst_10 [1] : vector<16x32xf32> to vector<16xf32>
    %23 = vector.shape_cast %22 : vector<16xf32> to vector<16x1xf32>
    %24 = arith.mulf %10, %23 : vector<16x1xf32>
    %25 = vector.shape_cast %24 : vector<16x1xf32> to vector<1x16x1xf32>
    %cst_11 = arith.constant dense<0.000000e+00> : vector<1xf32>
    %26 = vector.multi_reduction <add>, %25, %cst_11 [1, 2] : vector<1x16x1xf32> to vector<1xf32>
    %27 = vector.shape_cast %26 : vector<1xf32> to vector<1x1x1xf32>
    %28 = vector.extract %27[0, 0, 0] : f32 from vector<1x1x1xf32>
    %cst_12 = arith.constant 2.000000e+00 : f32
    %29 = vector.broadcast %cst_12 : f32 to vector<16x4xf32>
    %30 = arith.mulf %29, %20 : vector<16x4xf32>
    %31 = vector.broadcast %6 : vector<1x4xf32> to vector<16x4xf32>
    %32 = arith.subf %31, %30 : vector<16x4xf32>
    %33 = arith.mulf %18, %32 : vector<16x4xf32>
    %34 = vector.shape_cast %33 : vector<16x4xf32> to vector<1x16x4xf32>
    %cst_13 = arith.constant dense<0.000000e+00> : vector<1xf32>
    %35 = vector.multi_reduction <add>, %34, %cst_13 [1, 2] : vector<1x16x4xf32> to vector<1xf32>
    %36 = vector.shape_cast %35 : vector<1xf32> to vector<1x1x1xf32>
    %37 = vector.extract %36[0, 0, 0] : f32 from vector<1x1x1xf32>
    %38 = arith.addf %28, %37 : f32
    %c0_14 = arith.constant 0 : index
    %39 = memref.load %arg7[%c0_14] : memref<2xf32, #tpu.memory_space<smem>>
    %40 = arith.addf %39, %38 : f32
    %c0_15 = arith.constant 0 : index
    %41 = memref.load %arg7[%c0_15] : memref<2xf32, #tpu.memory_space<smem>>
    memref.store %40, %arg7[%c0_15] : memref<2xf32, #tpu.memory_space<smem>>
    %c1_16 = arith.constant 1 : index
    %42 = memref.load %arg7[%c1_16] : memref<2xf32, #tpu.memory_space<smem>>
    %43 = vector.shape_cast %10 : vector<16x1xf32> to vector<1x16x1xf32>
    %cst_17 = arith.constant dense<0.000000e+00> : vector<1xf32>
    %44 = vector.multi_reduction <add>, %43, %cst_17 [1, 2] : vector<1x16x1xf32> to vector<1xf32>
    %45 = vector.shape_cast %44 : vector<1xf32> to vector<1x1x1xf32>
    %46 = vector.extract %45[0, 0, 0] : f32 from vector<1x1x1xf32>
    %47 = arith.addf %42, %46 : f32
    %c1_18 = arith.constant 1 : index
    %48 = memref.load %arg7[%c1_18] : memref<2xf32, #tpu.memory_space<smem>>
    memref.store %47, %arg7[%c1_18] : memref<2xf32, #tpu.memory_space<smem>>
    %c0_i32_19 = arith.constant 0 : i32
    %49 = arith.cmpi eq, %arg1, %c0_i32_19 : i32
    %50 = arith.extui %49 : i1 to i32
    %c0_i32_20 = arith.constant 0 : i32
    %51 = arith.cmpi ne, %50, %c0_i32_20 : i32
    scf.if %51 {
      %57 = tpu.iota {dimensions = array<i32: 0>} : vector<8x128xi32>
      %58 = tpu.iota {dimensions = array<i32: 1>} : vector<8x128xi32>
      %c0_i32_24 = arith.constant 0 : i32
      %59 = vector.broadcast %c0_i32_24 : i32 to vector<8x128xi32>
      %60 = arith.cmpi eq, %57, %59 : vector<8x128xi32>
      %c0_i32_25 = arith.constant 0 : i32
      %61 = vector.broadcast %c0_i32_25 : i32 to vector<8x128xi32>
      %62 = arith.cmpi eq, %58, %61 : vector<8x128xi32>
      %63 = arith.andi %60, %62 : vector<8x128xi1>
      %c0_26 = arith.constant 0 : index
      %64 = memref.load %arg7[%c0_26] : memref<2xf32, #tpu.memory_space<smem>>
      %c0_i32_27 = arith.constant 0 : i32
      %65 = vector.broadcast %c0_i32_27 : i32 to vector<8x128xi32>
      %66 = arith.cmpi eq, %57, %65 : vector<8x128xi32>
      %c1_i32 = arith.constant 1 : i32
      %67 = vector.broadcast %c1_i32 : i32 to vector<8x128xi32>
      %68 = arith.cmpi eq, %58, %67 : vector<8x128xi32>
      %69 = arith.andi %66, %68 : vector<8x128xi1>
      %c1_28 = arith.constant 1 : index
      %70 = memref.load %arg7[%c1_28] : memref<2xf32, #tpu.memory_space<smem>>
      %cst_29 = arith.constant 0.000000e+00 : f32
      %71 = vector.broadcast %70 : f32 to vector<8x128xf32>
      %72 = vector.broadcast %cst_29 : f32 to vector<8x128xf32>
      %73 = arith.select %69, %71, %72 : vector<8x128xi1>, vector<8x128xf32>
      %74 = vector.broadcast %64 : f32 to vector<8x128xf32>
      %75 = arith.select %63, %74, %73 : vector<8x128xi1>, vector<8x128xf32>
      %c0_30 = arith.constant 0 : index
      %c0_31 = arith.constant 0 : index
      %76 = vector.load %arg6[%c0_30, %c0_31] : memref<8x128xf32, #tpu.memory_space<vmem>>, vector<8x128xf32>
      tpu.vector_store %arg6[%c0_30, %c0_31], %75 {strides = array<i32>} : memref<8x128xf32, #tpu.memory_space<vmem>>, vector<8x128xf32>,
    } else {
    }
    %c0_i32_21 = arith.constant 0 : i32
    %52 = arith.cmpi eq, %arg1, %c0_i32_21 : i32
    %c0_i32_22 = arith.constant 0 : i32
    %53 = arith.cmpi eq, %arg0, %c0_i32_22 : i32
    %54 = arith.andi %52, %53 : i1
    %55 = arith.extui %54 : i1 to i32
    %c0_i32_23 = arith.constant 0 : i32
    %56 = arith.cmpi ne, %55, %c0_i32_23 : i32
    scf.if %56 {
      %c0_24 = arith.constant 0 : index
      %c0_25 = arith.constant 0 : index
      %57 = vector.load %arg5[%c0_24, %c0_25] : memref<4x32xf32, #tpu.memory_space<vmem>>, vector<4x32xf32>
      %c0_26 = arith.constant 0 : index
      %c0_27 = arith.constant 0 : index
      %58 = vector.load %arg4[%c0_26, %c0_27] : memref<2x4xf32, #tpu.memory_space<vmem>>, vector<1x4xf32>
      %59 = arith.mulf %57, %57 : vector<4x32xf32>
      %cst_28 = arith.constant dense<0.000000e+00> : vector<4xf32>
      %60 = vector.multi_reduction <add>, %59, %cst_28 [1] : vector<4x32xf32> to vector<4xf32>
      %61 = vector.shape_cast %60 : vector<4xf32> to vector<4x1xf32>
      %cst_29 = arith.constant dense<0.000000e+00> : vector<4x4xf32>
      %62 = tpu.matmul %57, %57, %cst_29 {dimension_numbers = #tpu.dot_dimension_numbers<[1], [1], [0], [0], [0, 0, 1, 0], [], []>} : vector<4x32xf32>, vector<4x32xf32>, vector<4x4xf32> -> vector<4x4xf32>
      %c1_30 = arith.constant 1 : index
      %c0_31 = arith.constant 0 : index
      %63 = vector.load %arg4[%c1_30, %c0_31] : memref<2x4xf32, #tpu.memory_space<vmem>>, vector<1x4xf32>
      %64 = vector.broadcast %61 : vector<4x1xf32> to vector<4x4xf32>
      %65 = vector.broadcast %63 : vector<1x4xf32> to vector<4x4xf32>
      %66 = arith.addf %64, %65 : vector<4x4xf32>
      %cst_32 = arith.constant 2.000000e+00 : f32
      %67 = vector.broadcast %cst_32 : f32 to vector<4x4xf32>
      %68 = arith.mulf %67, %62 : vector<4x4xf32>
      %69 = arith.subf %66, %68 : vector<4x4xf32>
      %cst_33 = arith.constant 0.000000e+00 : f32
      %70 = vector.broadcast %cst_33 : f32 to vector<4x4xf32>
      %71 = arith.maximumf %69, %70 : vector<4x4xf32>
      %72 = tpu.iota {dimensions = array<i32: 0>} : vector<4x4xi32>
      %73 = tpu.iota {dimensions = array<i32: 1>} : vector<4x4xi32>
      %cst_34 = arith.constant 5.000000e-01 : f32
      %74 = vector.broadcast %cst_34 : f32 to vector<1x4xf32>
      %75 = arith.cmpf ogt, %58, %74 : vector<1x4xf32>
      %76 = tpu.transpose %58, [1, 0] : vector<1x4xf32> -> vector<4x1xf32>
      %cst_35 = arith.constant 5.000000e-01 : f32
      %77 = vector.broadcast %cst_35 : f32 to vector<4x1xf32>
      %78 = arith.cmpf ogt, %76, %77 : vector<4x1xf32>
      %79 = vector.broadcast %75 : vector<1x4xi1> to vector<4x4xi1>
      %80 = vector.broadcast %78 : vector<4x1xi1> to vector<4x4xi1>
      %81 = arith.andi %79, %80 : vector<4x4xi1>
      %82 = arith.cmpi ne, %72, %73 : vector<4x4xi32>
      %83 = arith.andi %81, %82 : vector<4x4xi1>
      %cst_36 = arith.constant 1.000000e+24 : f32
      %84 = vector.broadcast %cst_36 : f32 to vector<4x4xf32>
      %85 = arith.select %83, %71, %84 : vector<4x4xi1>, vector<4x4xf32>
      %86 = vector.shape_cast %58 : vector<1x4xf32> to vector<1x1x4xf32>
      %cst_37 = arith.constant dense<0.000000e+00> : vector<1xf32>
      %87 = vector.multi_reduction <add>, %86, %cst_37 [1, 2] : vector<1x1x4xf32> to vector<1xf32>
      %88 = vector.shape_cast %87 : vector<1xf32> to vector<1x1x1xf32>
      %89 = vector.extract %88[0, 0, 0] : f32 from vector<1x1x1xf32>
      %cst_38 = arith.constant 2.000000e+00 : f32
      %90 = arith.cmpf oge, %89, %cst_38 : f32
      %91 = vector.shape_cast %85 : vector<4x4xf32> to vector<1x4x4xf32>
      %cst_39 = arith.constant dense<0x7F800000> : vector<1xf32>
      %92 = vector.multi_reduction <minimumf>, %91, %cst_39 [1, 2] : vector<1x4x4xf32> to vector<1xf32>
      %93 = vector.shape_cast %92 : vector<1xf32> to vector<1x1x1xf32>
      %94 = vector.extract %93[0, 0, 0] : f32 from vector<1x1x1xf32>
      %cst_40 = arith.constant 0.000000e+00 : f32
      %95 = arith.subf %cst_40, %94 : f32
      %cst_41 = arith.constant 0.000000e+00 : f32
      %96 = arith.select %90, %95, %cst_41 : f32
      %97 = tpu.iota {dimensions = array<i32: 0>} : vector<8x128xi32>
      %98 = tpu.iota {dimensions = array<i32: 1>} : vector<8x128xi32>
      %c0_42 = arith.constant 0 : index
      %c0_43 = arith.constant 0 : index
      %99 = vector.load %arg6[%c0_42, %c0_43] : memref<8x128xf32, #tpu.memory_space<vmem>>, vector<8x128xf32>
      %c0_i32_44 = arith.constant 0 : i32
      %100 = vector.broadcast %c0_i32_44 : i32 to vector<8x128xi32>
      %101 = arith.cmpi eq, %97, %100 : vector<8x128xi32>
      %c2_i32 = arith.constant 2 : i32
      %102 = vector.broadcast %c2_i32 : i32 to vector<8x128xi32>
      %103 = arith.cmpi eq, %98, %102 : vector<8x128xi32>
      %104 = arith.andi %101, %103 : vector<8x128xi1>
      %cst_45 = arith.constant 0.000000e+00 : f32
      %105 = vector.broadcast %96 : f32 to vector<8x128xf32>
      %106 = vector.broadcast %cst_45 : f32 to vector<8x128xf32>
      %107 = arith.select %104, %105, %106 : vector<8x128xi1>, vector<8x128xf32>
      %108 = arith.addf %99, %107 : vector<8x128xf32>
      %c0_46 = arith.constant 0 : index
      %c0_47 = arith.constant 0 : index
      %109 = vector.load %arg6[%c0_46, %c0_47] : memref<8x128xf32, #tpu.memory_space<vmem>>, vector<8x128xf32>
      tpu.vector_store %arg6[%c0_46, %c0_47], %108 {strides = array<i32>} : memref<8x128xf32, #tpu.memory_space<vmem>>, vector<8x128xf32>,
    } else {
    }
    return
  }
  func.func @transform_0(%arg0: i32, %arg1: i32) -> (i32, i32) {
    %c1_i32 = arith.constant 1 : i32
    %0 = arith.muli %arg0, %c1_i32 : i32
    %1 = arith.addi %0, %arg1 : i32
    %c0_i32 = arith.constant 0 : i32
    %c0_i32_0 = arith.constant 0 : i32
    return %1, %c0_i32 : i32, i32
  }
  func.func @transform_1(%arg0: i32, %arg1: i32) -> (i32, i32) {
    %c1_i32 = arith.constant 1 : i32
    %0 = arith.muli %arg0, %c1_i32 : i32
    %1 = arith.addi %0, %arg1 : i32
    %c0_i32 = arith.constant 0 : i32
    %c0_i32_0 = arith.constant 0 : i32
    return %1, %c0_i32 : i32, i32
  }
  func.func @transform_2(%arg0: i32, %arg1: i32) -> (i32, i32) {
    %c0_i32 = arith.constant 0 : i32
    %c0_i32_0 = arith.constant 0 : i32
    %c0_i32_1 = arith.constant 0 : i32
    return %c0_i32, %c0_i32_0 : i32, i32
  }
  func.func @transform_3(%arg0: i32, %arg1: i32) -> (i32, i32) {
    %c0_i32 = arith.constant 0 : i32
    %c0_i32_0 = arith.constant 0 : i32
    %c0_i32_1 = arith.constant 0 : i32
    return %c0_i32, %c0_i32_0 : i32, i32
  }
  func.func @transform_4(%arg0: i32, %arg1: i32) -> (i32, i32) {
    %c0_i32 = arith.constant 0 : i32
    %c0_i32_0 = arith.constant 0 : i32
    return %arg0, %c0_i32 : i32, i32
  }
}

</mosaic_0001>

<llo_original>
// kernel: _ii_loss_impl.1
$region0: #{_ii_loss_impl.1}
  #allocation0 [shape = 'u32[]', space=smem, size = 0x4, offset = 0x4, fixed_abs, tag = 'smem constant byte address 0x4 - core index']
  #allocation1 [shape = 'u32[144,128]{1,0:T(1,128)}', space=vmem, size = 0x12000, scoped, tag = 'internal scratch']
  #allocation2 [shape = 'f32[2]{0:T(128)}', space=smem, size = 0x200, scoped, tag = 'scratch operand']
  %s0 = inlined_call_operand.vmem [shape: bf16[16,32], index: 0, kind: input, shape index: {}]
  %s1 = inlined_call_operand.vmem [shape: s32[16,1], index: 1, kind: input, shape index: {}]
  %s2 = inlined_call_operand.vmem [shape: f32[2,4], index: 2, kind: input, shape index: {}]
  %s3 = inlined_call_operand.vmem [shape: f32[4,32], index: 3, kind: input, shape index: {}]
  %s4 = inlined_call_operand.vmem [shape: f32[8,128], index: 4, kind: output, shape index: {}]
  %s5 = sld [smem:[#allocation0]]
  $region38: #{_ii_loss_impl.1} parent=0
    _
  %s7 = ssub.s32 1, %s5
  %s8 = scalar_select 0, %s7, %s5
  // Predicated region
  $region2: #{_ii_loss_impl.1} parent=0 // pred_check
    _
  $region3: #{_ii_loss_impl.1} parent=0 // pred_check_branch
    %10 = sbr.rel (0) target = $region5
  $region4: #{_ii_loss_impl.1} parent=0 // pred_region
    %s11 = sadd.s32 0, 0
    %s12 = smul.u32 2, %s11
    %p13 = scmp.lt.s32.totalorder %s12, 1
    %s14 = scalar_select %p13, %s12, 1
    %s15 = smul.addr %s14, 4
    %s16 = scalar_lea.vmem %s0, %s15
    %s17 = sadd.s32 0, 0
    %s18 = smul.u32 2, %s17
  $region5: #{_ii_loss_impl.1} parent=0 // pred_fallthru
    _
  // Predicated region
  $region6: #{_ii_loss_impl.1} parent=0 // pred_check
    _
  $region7: #{_ii_loss_impl.1} parent=0 // pred_check_branch
    %20 = sbr.rel (0) target = $region9
  $region8: #{_ii_loss_impl.1} parent=0 // pred_region
    %s21 = sadd.s32 0, 0
    %s22 = smul.u32 2, %s21
    %p23 = scmp.lt.s32.totalorder %s22, 1
    %s24 = scalar_select %p23, %s22, 1
    %s25 = smul.addr %s24, 8
    %s26 = scalar_lea.vmem %s1, %s25
    %s27 = sadd.s32 0, 0
    %s28 = smul.u32 2, %s27
  $region9: #{_ii_loss_impl.1} parent=0 // pred_fallthru
    _
  // Predicated region
  $region10: #{_ii_loss_impl.1} parent=0 // pred_check
    _
  $region11: #{_ii_loss_impl.1} parent=0 // pred_check_branch
    %30 = sbr.rel (0) target = $region13
  $region12: #{_ii_loss_impl.1} parent=0 // pred_region
    _
  $region13: #{_ii_loss_impl.1} parent=0 // pred_fallthru
    _
  // Predicated region
  $region14: #{_ii_loss_impl.1} parent=0 // pred_check
    _
  $region15: #{_ii_loss_impl.1} parent=0 // pred_check_branch
    %32 = sbr.rel (0) target = $region17
  $region16: #{_ii_loss_impl.1} parent=0 // pred_region
    _
  $region17: #{_ii_loss_impl.1} parent=0 // pred_fallthru
    _
  %s33 = sadd.s32 0, 0
  %s34 = smul.u32 2, %s33
  %p35 = scmp.lt.s32.totalorder %s34, 1
  %s36 = scalar_select %p35, %s34, 1
  %s37 = smul.addr %s36, 4
  %s38 = scalar_lea.vmem %s0, %s37
  %s39 = sadd.s32 0, 0
  %s40 = smul.u32 2, %s39
  %p41 = scmp.lt.s32.totalorder %s40, 1
  %s42 = scalar_select %p41, %s40, 1
  %s43 = smul.addr %s42, 8
  %s44 = scalar_lea.vmem %s1, %s43
  %s45 = sadd.s32 0, 0
  %s46 = smul.u32 2, %s45
  %p47 = scmp.lt.s32.totalorder %s46, 1
  %s48 = scalar_select %p47, %s46, 1
  %s49 = smul.addr %s48, 4
  %s50 = scalar_lea.vmem %s0, %s49
  %s51 = sadd.s32 0, 0
  %s52 = smul.u32 2, %s51
  %s53 = sadd.s32 0, 0
  %s54 = smul.u32 2, %s53
  %p55 = scmp.lt.s32.totalorder %s54, 1
  %s56 = scalar_select %p55, %s54, 1
  %s57 = smul.addr %s56, 8
  %s58 = scalar_lea.vmem %s1, %s57
  %s59 = sadd.s32 0, 0
  %s60 = smul.u32 2, %s59
  %p61 = scmp.eq.s32.totalorder 0, 0
  // Predicated region
  $region18: #{_ii_loss_impl.1} parent=0 // pred_check
    %p62 = pneg %p61
  $region19: #{_ii_loss_impl.1} parent=0 // pred_check_branch
    %64 = sbr.rel (%p62) target = $region21
  $region20: #{_ii_loss_impl.1} parent=0 // pred_region
    %s65 = scalar_lea.smem [#allocation2], 0
    %66 = sst [smem:[%s65]] 0.0
    %s67 = scalar_lea.smem [#allocation2], 1
    %68 = sst [smem:[%s67]] 0.0
  $region21: #{_ii_loss_impl.1} parent=0 // pred_fallthru
    _
  %v69 = vld [vmem:[%s50] sm:$0xf]
  %v70 = vld [vmem:[%s50 + $0x4] sm:$0xf]
  %v71 = vunpack.c.l.bf16 %v69
  %v72 = vunpack.c.l.bf16 %v70
  %v73 = vld [vmem:[%s58] sm:$0xff]
  %v74 = vld [vmem:[%s58 + $0x8] sm:$0xff]
  %v75 = vld [vmem:[%s2 + $0x1] sm:$0x1]
  %vm76 = vcmp.ge.s32.totalorder %v73, 0
  %vm77 = vcmp.ge.s32.totalorder %v74, 0
  %v78 = vsel %vm76, 1, 0
  %v79 = vsel %vm77, 1, 0
  %v80 = vcvt.s32.f32 %v78
  %v81 = vcvt.s32.f32 %v79
  %v82 = vlaneseq
  %v83 = vand.u32 %v82, 127
  %84 = vset.pattern.permute.xlu0 0
  %85 = vperm.xlu0 %84, %v73
  %v86 = vpop.permute.xlu0 %85
  %87 = vset.pattern.permute.xlu0 0
  %88 = vperm.xlu0 %87, %v74
  %v89 = vpop.permute.xlu0 %88
  %vm90 = vcmp.eq.s32.totalorder %v83, %v86
  %vm91 = vcmp.eq.s32.totalorder %v83, %v89
  %92 = vset.pattern.permute.xlu0 0
  %93 = vperm.xlu0 %92, %v78
  %v94 = vpop.permute.xlu0 %93
  %95 = vset.pattern.permute.xlu0 0
  %96 = vperm.xlu0 %95, %v79
  %v97 = vpop.permute.xlu0 %96
  %vm98 = vcmp.eq.s32.totalorder %v94, 1
  %vm99 = vcmp.eq.s32.totalorder %v97, 1
  %vm100 = vmand %vm90, %vm98
  %vm101 = vmand %vm91, %vm99
  %v102 = vsel %vm100, 1.0, 0.0
  %v103 = vsel %vm101, 1.0, 0.0
  %v104 = vld [vmem:[%s3] sm:$0xf]
  %vm105 = vcmask 261120
  %v107 = vsel %vm105, %v71, 0
  %v110 = vsel %vm105, %v72, 0
  %v113 = vsel %vm105, %v104, 0
  %115 = vmatprep.subr.mxu0 0.0
  %116 = vmatpush1.xpose.msra.mxu0 %v113
  %117 = vmatprep.subr.mxu0 0.0
  %118 = vmatpush1.xpose.msra.mxu0 0.0
  %119 = vmatprep.subr.mxu0 0.0
  %120 = vmatpush1.xpose.msra.mxu0 0.0
  %121 = vmatprep.subr.mxu0 0.0
  %122 = vmatpush1.xpose.msra.mxu0 0.0
  %123 = vmatprep.subr.mxu0 0.0
  %124 = vmatpush1.xpose.msra.mxu0 0.0
  %125 = vmatprep.subr.mxu0 0.0
  %126 = vmatpush1.xpose.msra.mxu0 0.0
  %127 = vmatprep.subr.mxu0 0.0
  %128 = vmatpush1.xpose.msra.mxu0 0.0
  %129 = vmatprep.subr.mxu0 0.0
  %130 = vmatpush1.xpose.msra.mxu0 0.0
  %131 = vmatprep.subr.mxu0 0.0
  %132 = vmatpush1.xpose.msra.mxu0 0.0
  %133 = vmatprep.subr.mxu0 0.0
  %134 = vmatpush1.xpose.msra.mxu0 0.0
  %135 = vmatprep.subr.mxu0 0.0
  %136 = vmatpush1.xpose.msra.mxu0 0.0
  %137 = vmatprep.subr.mxu0 0.0
  %138 = vmatpush1.xpose.msra.mxu0 0.0
  %139 = vmatprep.subr.mxu0 0.0
  %140 = vmatpush1.xpose.msra.mxu0 0.0
  %141 = vmatprep.subr.mxu0 0.0
  %142 = vmatpush1.xpose.msra.mxu0 0.0
  %143 = vmatprep.subr.mxu0 0.0
  %144 = vmatpush1.xpose.msra.mxu0 0.0
  %145 = vmatprep.subr.mxu0 0.0
  %146 = vmatpush1.xpose.msra.mxu0 0.0
  %147 = vmatprep.subr.mxu0 0.0
  %148 = vmatpush1.xpose.msra.mxu0 0.0
  %149 = vmatprep.subr.mxu0 0.0
  %150 = vmatpush1.xpose.msra.mxu0 0.0
  %151 = vmatprep.subr.mxu0 0.0
  %152 = vmatpush1.xpose.msra.mxu0 0.0
  %153 = vmatprep.subr.mxu0 0.0
  %154 = vmatpush1.xpose.msra.mxu0 0.0
  %155 = vmatprep.subr.mxu0 0.0
  %156 = vmatpush1.xpose.msra.mxu0 0.0
  %157 = vmatprep.subr.mxu0 0.0
  %158 = vmatpush1.xpose.msra.mxu0 0.0
  %159 = vmatprep.subr.mxu0 0.0
  %160 = vmatpush1.xpose.msra.mxu0 0.0
  %161 = vmatprep.subr.mxu0 0.0
  %162 = vmatpush1.xpose.msra.mxu0 0.0
  %163 = vmatprep.subr.mxu0 0.0
  %164 = vmatpush1.xpose.msra.mxu0 0.0
  %165 = vmatprep.subr.mxu0 0.0
  %166 = vmatpush1.xpose.msra.mxu0 0.0
  %167 = vmatprep.subr.mxu0 0.0
  %168 = vmatpush1.xpose.msra.mxu0 0.0
  %169 = vmatprep.subr.mxu0 0.0
  %170 = vmatpush1.xpose.msra.mxu0 0.0
  %171 = vmatprep.subr.mxu0 0.0
  %172 = vmatpush1.xpose.msra.mxu0 0.0
  %173 = vmatprep.subr.mxu0 0.0
  %174 = vmatpush1.xpose.msra.mxu0 0.0
  %175 = vmatprep.subr.mxu0 0.0
  %176 = vmatpush1.xpose.msra.mxu0 0.0
  %177 = vmatprep.subr.mxu0 0.0
  %178 = vmatpush1.xpose.msra.mxu0 0.0
  %179 = vmatprep.mubr.f32.mxu0 0.0
  %180 = vmatmul.mubr.f32.gmra.mrb[0].mxu0 %v107
  %v181 = vpop.f32.mrb[0].mxu0
  %v182 = vadd.f32 0.0, %v181
  %v183 = vpop.f32.mrb[0].mxu0
  %184 = vmatprep.mubr.f32.mxu0 0.0
  %185 = vmatmul.mubr.f32.gmra.mrb[0].mxu0 %v110
  %v186 = vpop.f32.mrb[0].mxu0
  %v187 = vadd.f32 0.0, %v186
  %v188 = vpop.f32.mrb[0].mxu0
  %189 = vdwg.mxu0
  %v190 = vmul.f32 %v71, %v71
  %v191 = vmul.f32 %v72, %v72
  %v192 = vsel %vm105, %v190, 0.0
  %193 = vadd.xlane.f32.xlu0 %v192
  %v194 = vpop.xlane.xlu0 %193
  %v195 = vsel %vm105, %v191, 0.0
  %196 = vadd.xlane.f32.xlu0 %v195
  %v197 = vpop.xlane.xlu0 %196
  %v198 = vmul.f32 %v80, %v194
  %v199 = vmul.f32 %v81, %v197
  %vm200 = vcmask 7168
  %v201 = vsel %vm200, %v198, 0.0
  %v202 = vsel %vm200, %v199, 0.0
  %v203 = vadd.f32 %v201, %v202
  %204 = vadd.xlane.f32.xlu0 %v203
  %v205 = vpop.xlane.xlu0 %204
  %v206 = vrot.slane %v205, 4
  %v207 = vadd.f32 %v205, %v206
  %v208 = vrot.slane %v207, 2
  %v209 = vadd.f32 %v207, %v208
  %v210 = vrot.slane %v209, 1
  %v211 = vadd.f32 %v209, %v210
  %s212 = vtos %v211
  %v213 = vmul.f32 %v182, 2.0
  %v214 = vmul.f32 %v187, 2.0
  %v215 = vlaneseq
  %v216 = vshrl.u32 %v215, 7
  %v217 = vsub.s32 0, %v216
  %v218 = vrot.slane %v75, %v217
  %v219 = vsub.f32 %v218, %v213
  %v220 = vsub.f32 %v218, %v214
  %v221 = vmul.f32 %v102, %v219
  %v222 = vmul.f32 %v103, %v220
  %vm223 = vcmask 31744
  %v224 = vsel %vm223, %v221, 0.0
  %v225 = vsel %vm223, %v222, 0.0
  %v226 = vadd.f32 %v224, %v225
  %227 = vadd.xlane.f32.xlu0 %v226
  %v228 = vpop.xlane.xlu0 %227
  %v229 = vrot.slane %v228, 4
  %v230 = vadd.f32 %v228, %v229
  %v231 = vrot.slane %v230, 2
  %v232 = vadd.f32 %v230, %v231
  %v233 = vrot.slane %v232, 1
  %v234 = vadd.f32 %v232, %v233
  %s235 = vtos %v234
  %s236 = sadd.f32 %s212, %s235
  %s237 = sld [smem:[#allocation2]]
  %s238 = sadd.f32 %s237, %s236
  %s239 = scalar_lea.smem [#allocation2], 0
  %240 = sst [smem:[%s239]] %s238
  %s241 = sld [smem:[#allocation2 + $0x1]]
  %v242 = vsel %vm200, %v80, 0.0
  %v243 = vsel %vm200, %v81, 0.0
  %v244 = vadd.f32 %v242, %v243
  %245 = vadd.xlane.f32.xlu0 %v244
  %v246 = vpop.xlane.xlu0 %245
  %v247 = vrot.slane %v246, 4
  %v248 = vadd.f32 %v246, %v247
  %v249 = vrot.slane %v248, 2
  %v250 = vadd.f32 %v248, %v249
  %v251 = vrot.slane %v250, 1
  %v252 = vadd.f32 %v250, %v251
  %s253 = vtos %v252
  %s254 = sadd.f32 %s241, %s253
  %s255 = scalar_lea.smem [#allocation2], 1
  %256 = sst [smem:[%s255]] %s254
  // Predicated region
  $region22: #{_ii_loss_impl.1} parent=0 // pred_check
    %p257 = pneg %p61
  $region23: #{_ii_loss_impl.1} parent=0 // pred_check_branch
    %259 = sbr.rel (%p257) target = $region25
  $region24: #{_ii_loss_impl.1} parent=0 // pred_region
    %v260 = vlaneseq
    %v261 = vshrl.u32 %v260, 7
    %vm262 = vcmp.eq.s32.totalorder %v261, 0
    %vm263 = vcmp.eq.s32.totalorder %v83, 0
    %vm264 = vmand %vm262, %vm263
    %s265 = sld [smem:[#allocation2]]
    %vm266 = vcmp.eq.s32.totalorder %v83, 1
    %vm267 = vmand %vm262, %vm266
    %s268 = sld [smem:[#allocation2 + $0x1]]
    %v269 = vstv %s268
    %v270 = vsel %vm267, %v269, 0.0
    %v271 = vstv %s265
    %v272 = vsel %vm264, %v271, %v270
    %273 = vst [vmem:[%s4] sm:$0xff] %v272
  $region25: #{_ii_loss_impl.1} parent=0 // pred_fallthru
    _
  %p274 = scmp.eq.s32.totalorder 0, 0
  %p275 = pnand %p61, %p274
  %p276 = pneg %p275
  // Predicated region
  $region26: #{_ii_loss_impl.1} parent=0 // pred_check
    _
  $region27: #{_ii_loss_impl.1} parent=0 // pred_check_branch
    %278 = sbr.rel (%p275) target = $region29
  $region28: #{_ii_loss_impl.1} parent=0 // pred_region
    %v279 = vld [vmem:[%s3] sm:$0xf]
    %v280 = vld [vmem:[%s2] sm:$0x1]
    %v281 = vmul.f32 %v279, %v279
    %vm282 = vcmask 257024
    %v283 = vsel %vm282, %v281, 0.0
    %284 = vadd.xlane.f32.xlu0 %v283
    %v285 = vpop.xlane.xlu0 %284
    %v287 = vsel %vm105, %v279, 0
    %289 = vmatprep.subr.mxu0 0.0
    %290 = vmatpush1.xpose.msra.mxu0 %v287
    %291 = vmatprep.subr.mxu0 0.0
    %292 = vmatpush1.xpose.msra.mxu0 0.0
    %293 = vmatprep.subr.mxu0 0.0
    %294 = vmatpush1.xpose.msra.mxu0 0.0
    %295 = vmatprep.subr.mxu0 0.0
    %296 = vmatpush1.xpose.msra.mxu0 0.0
    %297 = vmatprep.subr.mxu0 0.0
    %298 = vmatpush1.xpose.msra.mxu0 0.0
    %299 = vmatprep.subr.mxu0 0.0
    %300 = vmatpush1.xpose.msra.mxu0 0.0
    %301 = vmatprep.subr.mxu0 0.0
    %302 = vmatpush1.xpose.msra.mxu0 0.0
    %303 = vmatprep.subr.mxu0 0.0
    %304 = vmatpush1.xpose.msra.mxu0 0.0
    %305 = vmatprep.subr.mxu0 0.0
    %306 = vmatpush1.xpose.msra.mxu0 0.0
    %307 = vmatprep.subr.mxu0 0.0
    %308 = vmatpush1.xpose.msra.mxu0 0.0
    %309 = vmatprep.subr.mxu0 0.0
    %310 = vmatpush1.xpose.msra.mxu0 0.0
    %311 = vmatprep.subr.mxu0 0.0
    %312 = vmatpush1.xpose.msra.mxu0 0.0
    %313 = vmatprep.subr.mxu0 0.0
    %314 = vmatpush1.xpose.msra.mxu0 0.0
    %315 = vmatprep.subr.mxu0 0.0
    %316 = vmatpush1.xpose.msra.mxu0 0.0
    %317 = vmatprep.subr.mxu0 0.0
    %318 = vmatpush1.xpose.msra.mxu0 0.0
    %319 = vmatprep.subr.mxu0 0.0
    %320 = vmatpush1.xpose.msra.mxu0 0.0
    %321 = vmatprep.subr.mxu0 0.0
    %322 = vmatpush1.xpose.msra.mxu0 0.0
    %323 = vmatprep.subr.mxu0 0.0
    %324 = vmatpush1.xpose.msra.mxu0 0.0
    %325 = vmatprep.subr.mxu0 0.0
    %326 = vmatpush1.xpose.msra.mxu0 0.0
    %327 = vmatprep.subr.mxu0 0.0
    %328 = vmatpush1.xpose.msra.mxu0 0.0
    %329 = vmatprep.subr.mxu0 0.0
    %330 = vmatpush1.xpose.msra.mxu0 0.0
    %331 = vmatprep.subr.mxu0 0.0
    %332 = vmatpush1.xpose.msra.mxu0 0.0
    %333 = vmatprep.subr.mxu0 0.0
    %334 = vmatpush1.xpose.msra.mxu0 0.0
    %335 = vmatprep.subr.mxu0 0.0
    %336 = vmatpush1.xpose.msra.mxu0 0.0
    %337 = vmatprep.subr.mxu0 0.0
    %338 = vmatpush1.xpose.msra.mxu0 0.0
    %339 = vmatprep.subr.mxu0 0.0
    %340 = vmatpush1.xpose.msra.mxu0 0.0
    %341 = vmatprep.subr.mxu0 0.0
    %342 = vmatpush1.xpose.msra.mxu0 0.0
    %343 = vmatprep.subr.mxu0 0.0
    %344 = vmatpush1.xpose.msra.mxu0 0.0
    %345 = vmatprep.subr.mxu0 0.0
    %346 = vmatpush1.xpose.msra.mxu0 0.0
    %347 = vmatprep.subr.mxu0 0.0
    %348 = vmatpush1.xpose.msra.mxu0 0.0
    %349 = vmatprep.subr.mxu0 0.0
    %350 = vmatpush1.xpose.msra.mxu0 0.0
    %351 = vmatprep.subr.mxu0 0.0
    %352 = vmatpush1.xpose.msra.mxu0 0.0
    %353 = vmatprep.mubr.f32.mxu0 0.0
    %354 = vmatmul.mubr.f32.gmra.mrb[0].mxu0 %v287
    %v355 = vpop.f32.mrb[0].mxu0
    %v356 = vadd.f32 0.0, %v355
    %v357 = vpop.f32.mrb[0].mxu0
    %358 = vdwg.mxu0
    %v359 = vld [vmem:[%s2 + $0x1] sm:$0x1]
    %v360 = vlaneseq
    %v361 = vshrl.u32 %v360, 7
    %v362 = vsub.s32 0, %v361
    %v363 = vrot.slane %v359, %v362
    %v364 = vadd.f32 %v285, %v363
    %v365 = vmul.f32 %v356, 2.0
    %v366 = vsub.f32 %v364, %v365
    %v367 = vmax.f32 %v366, 0.0
    %v368 = vlaneseq
    %v369 = vshrl.u32 %v368, 7
    %vm370 = vcmp.gt.f32.partialorder %v280, 0.5
    %371 = vxpose.xlu0.b32.start [1/16] %v280, 128
    %372 = vxpose.xlu0.b32.cont [2/16] 0.0, 128
    %373 = vxpose.xlu0.b32.cont [3/16] 0.0, 128
    %374 = vxpose.xlu0.b32.cont [4/16] 0.0, 128
    %375 = vxpose.xlu0.b32.cont [5/16] 0.0, 128
    %376 = vxpose.xlu0.b32.cont [6/16] 0.0, 128
    %377 = vxpose.xlu0.b32.cont [7/16] 0.0, 128
    %378 = vxpose.xlu0.b32.cont [8/16] 0.0, 128
    %379 = vxpose.xlu0.b32.cont [9/16] 0.0, 128
    %380 = vxpose.xlu0.b32.cont [10/16] 0.0, 128
    %381 = vxpose.xlu0.b32.cont [11/16] 0.0, 128
    %382 = vxpose.xlu0.b32.cont [12/16] 0.0, 128
    %383 = vxpose.xlu0.b32.cont [13/16] 0.0, 128
    %384 = vxpose.xlu0.b32.cont [14/16] 0.0, 128
    %385 = vxpose.xlu0.b32.cont [15/16] 0.0, 128
    %386 = vxpose.xlu0.b32.end [16/16] 0.0, 128
    %v387 = vpop.trf.xlu0
    %v388 = vpop.trf.xlu0
    %v389 = vpop.trf.xlu0
    %v390 = vpop.trf.xlu0
    %v391 = vpop.trf.xlu0
    %v392 = vpop.trf.xlu0
    %v393 = vpop.trf.xlu0
    %v394 = vpop.trf.xlu0
    %v395 = vpop.trf.xlu0
    %v396 = vpop.trf.xlu0
    %v397 = vpop.trf.xlu0
    %v398 = vpop.trf.xlu0
    %v399 = vpop.trf.xlu0
    %v400 = vpop.trf.xlu0
    %v401 = vpop.trf.xlu0
    %v402 = vpop.trf.xlu0
    %vm403 = vcmp.gt.f32.partialorder %v387, 0.5
    %v404 = vsel %vm370, 1, 0
    %v405 = vlaneseq
    %v406 = vshrl.u32 %v405, 7
    %v407 = vsub.s32 0, %v406
    %v408 = vrot.slane %v404, %v407
    %vm409 = vcmp.eq.s32.totalorder %v408, 1
    %v410 = vsel %vm403, 1, 0
    %411 = vset.pattern.permute.xlu0 0
    %412 = vperm.xlu0 %411, %v410
    %v413 = vpop.permute.xlu0 %412
    %vm414 = vcmp.eq.s32.totalorder %v413, 1
    %vm415 = vmand %vm409, %vm414
    %vm416 = vcmp.ne.s32.totalorder %v369, %v83
    %vm417 = vmand %vm415, %vm416
    %v418 = vsel %vm417, %v367, 1e+24
    %vm419 = vcmask 24576
    %v420 = vsel %vm419, %v280, 0.0
    %421 = vadd.xlane.f32.xlu0 %v420
    %v422 = vpop.xlane.xlu0 %421
    %v423 = vrot.slane %v422, 4
    %v424 = vadd.f32 %v422, %v423
    %v425 = vrot.slane %v424, 2
    %v426 = vadd.f32 %v424, %v425
    %v427 = vrot.slane %v426, 1
    %v428 = vadd.f32 %v426, %v427
    %s429 = vtos %v428
    %p430 = scmp.ge.f32.partialorder %s429, 2.0
    %vm431 = vcmask 27648
    %v432 = vsel %vm431, %v418, inf
    %433 = vmin.xlane.f32.xlu0 %v432
    %v434 = vpop.xlane.xlu0 %433
    %v435 = vrot.slane %v434, 4
    %v436 = vmin.f32 %v434, %v435
    %v437 = vrot.slane %v436, 2
    %v438 = vmin.f32 %v436, %v437
    %v439 = vrot.slane %v438, 1
    %v440 = vmin.f32 %v438, %v439
    %s441 = vtos %v440
    %s442 = ssub.f32 0.0, %s441
    %s443 = scalar_select %p430, %s442, 0.0
    %v444 = vld [vmem:[%s4] sm:$0xff]
    %vm445 = vcmp.eq.s32.totalorder %v369, 0
    %vm446 = vcmp.eq.s32.totalorder %v83, 2
    %vm447 = vmand %vm445, %vm446
    %v448 = vstv %s443
    %v449 = vsel %vm447, %v448, 0.0
    %v450 = vadd.f32 %v444, %v449
    %451 = vst [vmem:[%s4] sm:$0xff] %v450
  $region29: #{_ii_loss_impl.1} parent=0 // pred_fallthru
    _
  // Predicated region
  $region30: #{_ii_loss_impl.1} parent=0 // pred_check
    _
  $region31: #{_ii_loss_impl.1} parent=0 // pred_check_branch
    %453 = sbr.rel (0) target = $region33
  $region32: #{_ii_loss_impl.1} parent=0 // pred_region
    _
  $region33: #{_ii_loss_impl.1} parent=0 // pred_fallthru
    _
  // Predicated region
  $region34: #{_ii_loss_impl.1} parent=0 // pred_check
    _
  $region35: #{_ii_loss_impl.1} parent=0 // pred_check_branch
    %455 = sbr.rel (0) target = $region37
  $region36: #{_ii_loss_impl.1} parent=0 // pred_region
    _
  $region37: #{_ii_loss_impl.1} parent=0 // pred_fallthru
    _

</llo_original>
